<compile_context>
chip_gen: v7x
topology: tpu7x:2x2x1
jax: 0.10.0
libtpu: 0.0.40
codegen_flags: <defaults>
</compile_context>

<pallas_src>
import jax
import jax.numpy as jnp
from jax.experimental import pallas as pl
from jax.experimental.pallas import tpu as pltpu


PACK = 8  # batch rows packed per lane-dense super-row (last dim becomes 8*C)


def coupling_kernel(z_ref, w1_ref, b1_ref, w2s_ref, w2t_ref, b2s_ref, b2t_ref,
                    comb_ref, gsum_ref, z_out_ref, dldj_ref):
    """One batch tile of the lane-packed coupling layer.

    z_ref: (TM, PACK*C) packed activations (PACK batch rows per super-row).
    Weights are block-diagonal expansions, so the packed matmuls are exactly
    the per-row MLP.  Constants are pre-folded in the wrapper:
        w1  <- mask * w1
        w2s <- w2[:, :C] * s_fac      ; b2s <- b2[:C] * s_fac
        w2t <- w2[:, C:] * (1 - mask) ; b2t <- b2[C:] * (1 - mask)
        comb = (1 - mask) / s_fac
    so the epilogue is just  s = tanh(s_pre) * comb.
    """
    z = z_ref[...]                                               # (TM, PC) f32

    zc = z.astype(w1_ref.dtype)
    h = jnp.dot(zc, w1_ref[...], preferred_element_type=jnp.float32) + b1_ref[...]
    h = jnp.maximum(h, 0.0)
    hc = h.astype(w2s_ref.dtype)

    s = jnp.dot(hc, w2s_ref[...], preferred_element_type=jnp.float32) + b2s_ref[...]
    t = jnp.dot(hc, w2t_ref[...], preferred_element_type=jnp.float32) + b2t_ref[...]

    s = jnp.tanh(s) * comb_ref[...]          # == tanh(s*s_fac)/s_fac * (1-mask)
    z_out_ref[...] = (z + t) * jnp.exp(s)
    # Per-packed-row log-det-Jacobian: group-sum of s over each C-lane block,
    # done on the MXU (avoids a lane->sublane relayout of a reshape+reduce).
    dldj_ref[...] = jnp.dot(s, gsum_ref[...], preferred_element_type=jnp.float32)


def _round_up(x, m):
    return ((x + m - 1) // m) * m


def coupling_layer_forward(z, ldj, mask, scaling_factor, w1, b1, w2, b2,
                           *, block_rows=2048, compute_dtype=jnp.float32):
    """Forward pass of CouplingLayer. Returns (z_new, ldj_new)."""
    B, C = z.shape
    H = w1.shape[1]
    P = PACK
    Cp, Hp = P * C, P * H

    # ---- hoisted per-call constants (all folding done once, in the wrapper) --
    mask_f = mask.astype(jnp.float32)
    inv_mask = 1.0 - mask_f
    s_fac = jnp.exp(scaling_factor.astype(jnp.float32))
    comb = inv_mask / s_fac                                       # (C,)

    w1m = mask_f[:, None] * w1.astype(jnp.float32)        # z*mask @ w1 == z @ (mask*w1)
    w2_s = w2[:, :C].astype(jnp.float32) * s_fac[None, :]
    w2_t = w2[:, C:].astype(jnp.float32) * inv_mask[None, :]
    b1_f = b1.astype(jnp.float32)
    b2_s = b2[:C].astype(jnp.float32) * s_fac
    b2_t = b2[C:].astype(jnp.float32) * inv_mask

    # ---- lane-dense packing: block-diagonal weight expansion (kron with I) ---
    eye = jnp.eye(P, dtype=jnp.float32)
    w1_bd = jnp.kron(eye, w1m).astype(compute_dtype)              # (Cp, Hp)
    w2s_bd = jnp.kron(eye, w2_s).astype(compute_dtype)            # (Hp, Cp)
    w2t_bd = jnp.kron(eye, w2_t).astype(compute_dtype)            # (Hp, Cp)
    gsum = jnp.kron(eye, jnp.ones((C, 1), jnp.float32))           # (Cp, P)
    b1_p = jnp.tile(b1_f, P).reshape(1, Hp)
    b2s_p = jnp.tile(b2_s, P).reshape(1, Cp)
    b2t_p = jnp.tile(b2_t, P).reshape(1, Cp)
    comb_p = jnp.tile(comb, P).reshape(1, Cp)

    # ---- batch tiling over super-rows ---------------------------------------
    rows = _round_up(B, P) // P
    if rows <= 8:
        tm = rows                              # single full-extent block
    else:
        tm = min(block_rows, _round_up(rows, 8))
        # Keep >= 2 grid steps when possible so both v7x TensorCores get work.
        if rows >= 16 and _round_up(rows, 8) <= tm:
            tm = _round_up(pl.cdiv(rows, 2), 8)
    rows_p = _round_up(rows, tm)
    b_tot = rows_p * P

    z_f = z.astype(jnp.float32)
    if b_tot != B:
        # TODO(synk): tail rows could be masked in-kernel instead of padding here.
        z_f = jnp.pad(z_f, ((0, b_tot - B), (0, 0)))
    z_packed = z_f.reshape(rows_p, Cp)         # free reshape (row-major, contiguous)

    grid = (rows_p // tm,)
    tiled = lambda shape: pl.BlockSpec(shape, lambda i: (i, 0))     # streams over batch
    resident = lambda shape: pl.BlockSpec(shape, lambda i: (0, 0))  # stays in VMEM

    w_bytes = jnp.dtype(compute_dtype).itemsize
    cost = pl.CostEstimate(
        flops=2 * rows_p * (Cp * Hp + 2 * Hp * Cp + Cp * P),
        transcendentals=2 * rows_p * Cp,  # tanh + exp per packed element
        bytes_accessed=(2 * rows_p * Cp * 4 + rows_p * P * 4
                        + (Cp * Hp + 2 * Hp * Cp) * w_bytes
                        + (Cp * P + Hp + 3 * Cp) * 4),
    )

    z_out, dldj = pl.pallas_call(
        coupling_kernel,
        out_shape=(
            jax.ShapeDtypeStruct((rows_p, Cp), jnp.float32),
            jax.ShapeDtypeStruct((rows_p, P), jnp.float32),
        ),
        grid=grid,
        in_specs=[
            tiled((tm, Cp)),        # z (lane-packed)
            resident((Cp, Hp)),     # w1 block-diag (mask folded)
            resident((1, Hp)),      # b1 (tiled)
            resident((Hp, Cp)),     # w2_s block-diag (s_fac folded)
            resident((Hp, Cp)),     # w2_t block-diag (1-mask folded)
            resident((1, Cp)),      # b2_s (tiled)
            resident((1, Cp)),      # b2_t (tiled)
            resident((1, Cp)),      # comb = (1-mask)/s_fac (tiled)
            resident((Cp, P)),      # group-sum matrix for ldj
        ],
        out_specs=(
            tiled((tm, Cp)),
            tiled((tm, P)),
        ),
        compiler_params=pltpu.CompilerParams(
            dimension_semantics=("parallel",),   # megacore sharding on v7x
            vmem_limit_bytes=32 * 1024 * 1024,
        ),
        cost_estimate=cost,
    )(z_packed, w1_bd, b1_p, w2s_bd, w2t_bd, b2s_p, b2t_p, comb_p, gsum)

    z_new = z_out.reshape(b_tot, C)[:B]
    ldj_new = ldj.astype(jnp.float32) + dldj.reshape(b_tot)[:B]
    return z_new, ldj_new


def reference_forward(z, ldj, mask, scaling_factor, w1, b1, w2, b2):
    z_in = z * mask[None, :]
    h = jnp.maximum(z_in @ w1 + b1, 0.0)
    nn_out = h @ w2 + b2
    C = z.shape[1]
    s, t = nn_out[:, :C], nn_out[:, C:]
    s_fac = jnp.exp(scaling_factor)[None, :]
    s = jnp.tanh(s * s_fac) / s_fac
    s = s * (1.0 - mask)[None, :]
    t = t * (1.0 - mask)[None, :]
    z_new = (z + t) * jnp.exp(s)
    ldj_new = ldj + jnp.sum(s, axis=1)
    return z_new, ldj_new


if __name__ == "__main__":
    C, H = 16, 32  # c_in, hidden width of the coupling network

    key = jax.random.PRNGKey(0)
    k_w1, k_b1, k_w2, k_b2, k_sf, k_data = jax.random.split(key, 6)

    # Alternating binary mask over features (registered buffer in PyTorch).
    mask = (jnp.arange(C) % 2).astype(jnp.float32)

    # nn.Parameter(torch.zeros(c_in)) -> zeros; use a nonzero deterministic
    # variant to exercise the s_fac path.
    scaling_factor = 0.1 * jax.random.normal(k_sf, (C,), dtype=jnp.float32)

    # Deterministic "network" parameters (MLP: C -> H -> 2C).
    w1 = 0.1 * jax.random.normal(k_w1, (C, H), dtype=jnp.float32)
    b1 = 0.1 * jax.random.normal(k_b1, (H,), dtype=jnp.float32)
    w2 = 0.1 * jax.random.normal(k_w2, (H, 2 * C), dtype=jnp.float32)
    b2 = 0.1 * jax.random.normal(k_b2, (2 * C,), dtype=jnp.float32)

    # Exercise: aligned batch, ragged batch (pads), and a batch large enough
    # to give >= 2 grid steps (multi-step streaming over resident weights).
    for B in (64, 13, 256):
        k_z, k_l, k_data = jax.random.split(k_data, 3)
        z = jax.random.normal(k_z, (B, C), dtype=jnp.float32)
        ldj = jax.random.normal(k_l, (B,), dtype=jnp.float32)

        z_out, ldj_out = coupling_layer_forward(
            z, ldj, mask, scaling_factor, w1, b1, w2, b2)
        jax.block_until_ready((z_out, ldj_out))

        z_ref, ldj_ref = reference_forward(
            z, ldj, mask, scaling_factor, w1, b1, w2, b2)

        assert z_out.shape == (B, C) and ldj_out.shape == (B,)
        assert jnp.allclose(z_out, z_ref, atol=1e-5, rtol=1e-5), f"z mismatch B={B}"
        assert jnp.allclose(ldj_out, ldj_ref, atol=1e-5, rtol=1e-5), f"ldj mismatch B={B}"

    print("KERNEL_OK")
</pallas_src>

<mosaic_0001>
module attributes {stable_mosaic.version = 11 : i64} {
  func.func @coupling_kernel(%arg0: i32, %arg1: memref<8x128xf32, #tpu.memory_space<vmem>>, %arg2: memref<128x256xf32, #tpu.memory_space<vmem>>, %arg3: memref<1x256xf32, #tpu.memory_space<vmem>>, %arg4: memref<256x128xf32, #tpu.memory_space<vmem>>, %arg5: memref<256x128xf32, #tpu.memory_space<vmem>>, %arg6: memref<1x128xf32, #tpu.memory_space<vmem>>, %arg7: memref<1x128xf32, #tpu.memory_space<vmem>>, %arg8: memref<1x128xf32, #tpu.memory_space<vmem>>, %arg9: memref<128x8xf32, #tpu.memory_space<vmem>>, %arg10: memref<8x128xf32, #tpu.memory_space<vmem>>, %arg11: memref<8x8xf32, #tpu.memory_space<vmem>>) attributes {dimension_semantics = [#tpu.dimension_semantics<parallel>], iteration_bounds = array<i64: 1>, scalar_prefetch = 0 : i64, scratch_operands = 0 : i64, tpu.core_type = #tpu.core_type<tc>, window_params = [{transform_indices = @transform_0, window_bounds = array<i64: 8, 128>}, {pipeline_mode = #tpu.pipeline_mode<synchronous>, transform_indices = @transform_1, window_bounds = array<i64: 128, 256>}, {pipeline_mode = #tpu.pipeline_mode<synchronous>, transform_indices = @transform_2, window_bounds = array<i64: 1, 256>}, {pipeline_mode = #tpu.pipeline_mode<synchronous>, transform_indices = @transform_3, window_bounds = array<i64: 256, 128>}, {pipeline_mode = #tpu.pipeline_mode<synchronous>, transform_indices = @transform_4, window_bounds = array<i64: 256, 128>}, {pipeline_mode = #tpu.pipeline_mode<synchronous>, transform_indices = @transform_5, window_bounds = array<i64: 1, 128>}, {pipeline_mode = #tpu.pipeline_mode<synchronous>, transform_indices = @transform_6, window_bounds = array<i64: 1, 128>}, {pipeline_mode = #tpu.pipeline_mode<synchronous>, transform_indices = @transform_7, window_bounds = array<i64: 1, 128>}, {pipeline_mode = #tpu.pipeline_mode<synchronous>, transform_indices = @transform_8, window_bounds = array<i64: 128, 8>}, {transform_indices = @transform_9, window_bounds = array<i64: 8, 128>}, {transform_indices = @transform_10, window_bounds = array<i64: 8, 8>}]} {
    %c0 = arith.constant 0 : index
    %c0_0 = arith.constant 0 : index
    %0 = vector.load %arg1[%c0, %c0_0] : memref<8x128xf32, #tpu.memory_space<vmem>>, vector<8x128xf32>
    %c0_1 = arith.constant 0 : index
    %c0_2 = arith.constant 0 : index
    %1 = vector.load %arg2[%c0_1, %c0_2] : memref<128x256xf32, #tpu.memory_space<vmem>>, vector<128x256xf32>
    %cst = arith.constant dense<0.000000e+00> : vector<8x256xf32>
    %2 = tpu.matmul %0, %1, %cst {dimension_numbers = #tpu.dot_dimension_numbers<[1], [0], [0], [1], [0, 0, 1, 1], [], []>} : vector<8x128xf32>, vector<128x256xf32>, vector<8x256xf32> -> vector<8x256xf32>
    %c0_3 = arith.constant 0 : index
    %c0_4 = arith.constant 0 : index
    %3 = vector.load %arg3[%c0_3, %c0_4] : memref<1x256xf32, #tpu.memory_space<vmem>>, vector<1x256xf32>
    %4 = vector.broadcast %3 : vector<1x256xf32> to vector<8x256xf32>
    %5 = arith.addf %2, %4 : vector<8x256xf32>
    %cst_5 = arith.constant 0.000000e+00 : f32
    %6 = vector.broadcast %cst_5 : f32 to vector<8x256xf32>
    %7 = arith.maximumf %5, %6 : vector<8x256xf32>
    %c0_6 = arith.constant 0 : index
    %c0_7 = arith.constant 0 : index
    %8 = vector.load %arg4[%c0_6, %c0_7] : memref<256x128xf32, #tpu.memory_space<vmem>>, vector<256x128xf32>
    %cst_8 = arith.constant dense<0.000000e+00> : vector<8x128xf32>
    %9 = tpu.matmul %7, %8, %cst_8 {dimension_numbers = #tpu.dot_dimension_numbers<[1], [0], [0], [1], [0, 0, 1, 1], [], []>} : vector<8x256xf32>, vector<256x128xf32>, vector<8x128xf32> -> vector<8x128xf32>
    %c0_9 = arith.constant 0 : index
    %c0_10 = arith.constant 0 : index
    %10 = vector.load %arg6[%c0_9, %c0_10] : memref<1x128xf32, #tpu.memory_space<vmem>>, vector<1x128xf32>
    %11 = vector.broadcast %10 : vector<1x128xf32> to vector<8x128xf32>
    %12 = arith.addf %9, %11 : vector<8x128xf32>
    %c0_11 = arith.constant 0 : index
    %c0_12 = arith.constant 0 : index
    %13 = vector.load %arg5[%c0_11, %c0_12] : memref<256x128xf32, #tpu.memory_space<vmem>>, vector<256x128xf32>
    %cst_13 = arith.constant dense<0.000000e+00> : vector<8x128xf32>
    %14 = tpu.matmul %7, %13, %cst_13 {dimension_numbers = #tpu.dot_dimension_numbers<[1], [0], [0], [1], [0, 0, 1, 1], [], []>} : vector<8x256xf32>, vector<256x128xf32>, vector<8x128xf32> -> vector<8x128xf32>
    %c0_14 = arith.constant 0 : index
    %c0_15 = arith.constant 0 : index
    %15 = vector.load %arg7[%c0_14, %c0_15] : memref<1x128xf32, #tpu.memory_space<vmem>>, vector<1x128xf32>
    %16 = vector.broadcast %15 : vector<1x128xf32> to vector<8x128xf32>
    %17 = arith.addf %14, %16 : vector<8x128xf32>
    %18 = math.tanh %12 : vector<8x128xf32>
    %c0_16 = arith.constant 0 : index
    %c0_17 = arith.constant 0 : index
    %19 = vector.load %arg8[%c0_16, %c0_17] : memref<1x128xf32, #tpu.memory_space<vmem>>, vector<1x128xf32>
    %20 = vector.broadcast %19 : vector<1x128xf32> to vector<8x128xf32>
    %21 = arith.mulf %18, %20 : vector<8x128xf32>
    %22 = arith.addf %0, %17 : vector<8x128xf32>
    %23 = math.exp %21 : vector<8x128xf32>
    %24 = arith.mulf %22, %23 : vector<8x128xf32>
    %c0_18 = arith.constant 0 : index
    %c0_19 = arith.constant 0 : index
    %25 = vector.load %arg10[%c0_18, %c0_19] : memref<8x128xf32, #tpu.memory_space<vmem>>, vector<8x128xf32>
    tpu.vector_store %arg10[%c0_18, %c0_19], %24 {strides = array<i32>} : memref<8x128xf32, #tpu.memory_space<vmem>>, vector<8x128xf32>,
    %c0_20 = arith.constant 0 : index
    %c0_21 = arith.constant 0 : index
    %26 = vector.load %arg9[%c0_20, %c0_21] : memref<128x8xf32, #tpu.memory_space<vmem>>, vector<128x8xf32>
    %cst_22 = arith.constant dense<0.000000e+00> : vector<8x8xf32>
    %27 = tpu.matmul %21, %26, %cst_22 {dimension_numbers = #tpu.dot_dimension_numbers<[1], [0], [0], [1], [0, 0, 1, 1], [], []>} : vector<8x128xf32>, vector<128x8xf32>, vector<8x8xf32> -> vector<8x8xf32>
    %c0_23 = arith.constant 0 : index
    %c0_24 = arith.constant 0 : index
    %28 = vector.load %arg11[%c0_23, %c0_24] : memref<8x8xf32, #tpu.memory_space<vmem>>, vector<8x8xf32>
    tpu.vector_store %arg11[%c0_23, %c0_24], %27 {strides = array<i32>} : memref<8x8xf32, #tpu.memory_space<vmem>>, vector<8x8xf32>,
    return
  }
  func.func @transform_0(%arg0: i32) -> (i32, i32) {
    %c0_i32 = arith.constant 0 : i32
    %c0_i32_0 = arith.constant 0 : i32
    return %arg0, %c0_i32 : i32, i32
  }
  func.func @transform_1(%arg0: i32) -> (i32, i32) {
    %c0_i32 = arith.constant 0 : i32
    %c0_i32_0 = arith.constant 0 : i32
    %c0_i32_1 = arith.constant 0 : i32
    return %c0_i32, %c0_i32_0 : i32, i32
  }
  func.func @transform_2(%arg0: i32) -> (i32, i32) {
    %c0_i32 = arith.constant 0 : i32
    %c0_i32_0 = arith.constant 0 : i32
    %c0_i32_1 = arith.constant 0 : i32
    return %c0_i32, %c0_i32_0 : i32, i32
  }
  func.func @transform_3(%arg0: i32) -> (i32, i32) {
    %c0_i32 = arith.constant 0 : i32
    %c0_i32_0 = arith.constant 0 : i32
    %c0_i32_1 = arith.constant 0 : i32
    return %c0_i32, %c0_i32_0 : i32, i32
  }
  func.func @transform_4(%arg0: i32) -> (i32, i32) {
    %c0_i32 = arith.constant 0 : i32
    %c0_i32_0 = arith.constant 0 : i32
    %c0_i32_1 = arith.constant 0 : i32
    return %c0_i32, %c0_i32_0 : i32, i32
  }
  func.func @transform_5(%arg0: i32) -> (i32, i32) {
    %c0_i32 = arith.constant 0 : i32
    %c0_i32_0 = arith.constant 0 : i32
    %c0_i32_1 = arith.constant 0 : i32
    return %c0_i32, %c0_i32_0 : i32, i32
  }
  func.func @transform_6(%arg0: i32) -> (i32, i32) {
    %c0_i32 = arith.constant 0 : i32
    %c0_i32_0 = arith.constant 0 : i32
    %c0_i32_1 = arith.constant 0 : i32
    return %c0_i32, %c0_i32_0 : i32, i32
  }
  func.func @transform_7(%arg0: i32) -> (i32, i32) {
    %c0_i32 = arith.constant 0 : i32
    %c0_i32_0 = arith.constant 0 : i32
    %c0_i32_1 = arith.constant 0 : i32
    return %c0_i32, %c0_i32_0 : i32, i32
  }
  func.func @transform_8(%arg0: i32) -> (i32, i32) {
    %c0_i32 = arith.constant 0 : i32
    %c0_i32_0 = arith.constant 0 : i32
    %c0_i32_1 = arith.constant 0 : i32
    return %c0_i32, %c0_i32_0 : i32, i32
  }
  func.func @transform_9(%arg0: i32) -> (i32, i32) {
    %c0_i32 = arith.constant 0 : i32
    %c0_i32_0 = arith.constant 0 : i32
    return %arg0, %c0_i32 : i32, i32
  }
  func.func @transform_10(%arg0: i32) -> (i32, i32) {
    %c0_i32 = arith.constant 0 : i32
    %c0_i32_0 = arith.constant 0 : i32
    return %arg0, %c0_i32 : i32, i32
  }
}

</mosaic_0001>

<llo_original>
// kernel: tpu_custom_call.1
$region0: #{tpu_custom_call.1}
  #allocation0 [shape = 'u32[]', space=smem, size = 0x4, offset = 0x4, fixed_abs, tag = 'smem constant byte address 0x4 - core index']
  #allocation1 [shape = 'u32[144,128]{1,0:T(1,128)}', space=vmem, size = 0x12000, scoped, tag = 'internal scratch']
  %s0 = inlined_call_operand.vmem [shape: f32[8,128], index: 0, kind: input, shape index: {}]
  %s1 = inlined_call_operand.hbm [shape: f32[128,256], index: 1, kind: input, shape index: {}]
  %s2 = inlined_call_operand.vmem [shape: f32[1,256], index: 2, kind: input, shape index: {}]
  %s3 = inlined_call_operand.hbm [shape: f32[256,128], index: 3, kind: input, shape index: {}]
  %s4 = inlined_call_operand.hbm [shape: f32[256,128], index: 4, kind: input, shape index: {}]
  %s5 = inlined_call_operand.vmem [shape: f32[1,128], index: 5, kind: input, shape index: {}]
  %s6 = inlined_call_operand.vmem [shape: f32[1,128], index: 6, kind: input, shape index: {}]
  %s7 = inlined_call_operand.vmem [shape: f32[1,128], index: 7, kind: input, shape index: {}]
  %s8 = inlined_call_operand.vmem [shape: f32[128,8], index: 8, kind: input, shape index: {}]
  %s9 = inlined_call_operand.hbm [shape: f32[8,128], index: 9, kind: output, shape index: {0}]
  %s10 = inlined_call_operand.hbm [shape: f32[8,8], index: 10, kind: output, shape index: {1}]
  %11 = xla_tuple %s9, %s10
  %s12 = sld [smem:[#allocation0]]
  $region66: #{tpu_custom_call.1} parent=0
    _
  %s14 = ssub.s32 1, %s12
  %s15 = scalar_select 0, %s14, %s12
  $region1: #{tpu_custom_call.1} parent=0
    #allocation2 [shape = 'u8[131072]{0}', space=vmem, size = 0x20000, scoped, tag = 'input window, operand 1, single buffered']
    #allocation3 [shape = 's32[1]{0}', space=sflag, size = 0x4, scoped, tag = 'scoped memory for tpu_custom_call.1']
    #allocation4 [shape = 's32[1]{0}', space=sflag, size = 0x4, scoped, tag = 'scoped memory for tpu_custom_call.1']
    #allocation5 [shape = 'u8[131072]{0}', space=vmem, size = 0x20000, scoped, tag = 'input window, operand 3, single buffered']
    #allocation6 [shape = 's32[1]{0}', space=sflag, size = 0x4, scoped, tag = 'scoped memory for tpu_custom_call.1']
    #allocation7 [shape = 'u8[131072]{0}', space=vmem, size = 0x20000, scoped, tag = 'input window, operand 4, single buffered']
    #allocation8 [shape = 'u8[4096]{0}', space=vmem, size = 0x1000, scoped, tag = 'output window, operand 0, single buffered']
    #allocation9 [shape = 'u8[4096]{0}', space=vmem, size = 0x1000, scoped, tag = 'output window, operand 1, single buffered']
    #allocation10 [shape = 's32[1]{0}', space=sflag, size = 0x4, scoped, tag = 'scoped memory for tpu_custom_call.1']
    %16 = vsyncpa [#allocation3], 0
    %17 = vsyncpa [#allocation6], 0
    %18 = vsyncpa [#allocation4], 0
    %19 = vsyncpa [#allocation10], 0
    // Predicated region
    $region2: #{tpu_custom_call.1} parent=1 // pred_check
      _
    $region3: #{tpu_custom_call.1} parent=1 // pred_check_branch
      %21 = sbr.rel (0) target = $region5
    $region4: #{tpu_custom_call.1} parent=1 // pred_region
      _
    $region5: #{tpu_custom_call.1} parent=1 // pred_fallthru
      _
    // Predicated region
    $region6: #{tpu_custom_call.1} parent=1 // pred_check
      _
    $region7: #{tpu_custom_call.1} parent=1 // pred_check_branch
      %23 = sbr.rel (0) target = $region9
    $region8: #{tpu_custom_call.1} parent=1 // pred_region
      %s25 = ssub.s32 4096, 4096
      %26 = vsyncadd [#allocation3], %s25
      %s27 = sshll.u32 [#allocation2], 4
      %s28 = int_to_ptr.vmem [resolvable:$true] %s27
      %33 = dma.hbm_to_vmem [thread:$0]  %s1, 4096, %s28, [#allocation3], 256, 256, 16
    $region9: #{tpu_custom_call.1} parent=1 // pred_fallthru
      _
    // Predicated region
    $region10: #{tpu_custom_call.1} parent=1 // pred_check
      _
    $region11: #{tpu_custom_call.1} parent=1 // pred_check_branch
      %35 = sbr.rel (0) target = $region13
    $region12: #{tpu_custom_call.1} parent=1 // pred_region
      _
    $region13: #{tpu_custom_call.1} parent=1 // pred_fallthru
      _
    // Predicated region
    $region14: #{tpu_custom_call.1} parent=1 // pred_check
      _
    $region15: #{tpu_custom_call.1} parent=1 // pred_check_branch
      %37 = sbr.rel (0) target = $region17
    $region16: #{tpu_custom_call.1} parent=1 // pred_region
      %s39 = ssub.s32 4096, 4096
      %40 = vsyncadd [#allocation6], %s39
      %s41 = sshll.u32 [#allocation5], 4
      %s42 = int_to_ptr.vmem [resolvable:$true] %s41
      %47 = dma.hbm_to_vmem [thread:$0]  %s3, 4096, %s42, [#allocation6], 128, 128, 8
    $region17: #{tpu_custom_call.1} parent=1 // pred_fallthru
      _
    // Predicated region
    $region18: #{tpu_custom_call.1} parent=1 // pred_check
      _
    $region19: #{tpu_custom_call.1} parent=1 // pred_check_branch
      %49 = sbr.rel (0) target = $region21
    $region20: #{tpu_custom_call.1} parent=1 // pred_region
      %s51 = ssub.s32 4096, 4096
      %52 = vsyncadd [#allocation6], %s51
      %s53 = sshll.u32 [#allocation7], 4
      %s54 = int_to_ptr.vmem [resolvable:$true] %s53
      %59 = dma.hbm_to_vmem [thread:$0]  %s4, 4096, %s54, [#allocation6], 128, 128, 8
    $region21: #{tpu_custom_call.1} parent=1 // pred_fallthru
      _
    // Predicated region
    $region22: #{tpu_custom_call.1} parent=1 // pred_check
      _
    $region23: #{tpu_custom_call.1} parent=1 // pred_check_branch
      %61 = sbr.rel (0) target = $region25
    $region24: #{tpu_custom_call.1} parent=1 // pred_region
      _
    $region25: #{tpu_custom_call.1} parent=1 // pred_fallthru
      _
    // Predicated region
    $region26: #{tpu_custom_call.1} parent=1 // pred_check
      _
    $region27: #{tpu_custom_call.1} parent=1 // pred_check_branch
      %63 = sbr.rel (0) target = $region29
    $region28: #{tpu_custom_call.1} parent=1 // pred_region
      _
    $region29: #{tpu_custom_call.1} parent=1 // pred_fallthru
      _
    // Predicated region
    $region30: #{tpu_custom_call.1} parent=1 // pred_check
      _
    $region31: #{tpu_custom_call.1} parent=1 // pred_check_branch
      %65 = sbr.rel (0) target = $region33
    $region32: #{tpu_custom_call.1} parent=1 // pred_region
      _
    $region33: #{tpu_custom_call.1} parent=1 // pred_fallthru
      _
    // Predicated region
    $region34: #{tpu_custom_call.1} parent=1 // pred_check
      _
    $region35: #{tpu_custom_call.1} parent=1 // pred_check_branch
      %67 = sbr.rel (0) target = $region37
    $region36: #{tpu_custom_call.1} parent=1 // pred_region
      _
    $region37: #{tpu_custom_call.1} parent=1 // pred_fallthru
      _
    // Predicated region
    $region38: #{tpu_custom_call.1} parent=1 // pred_check
      _
    $region39: #{tpu_custom_call.1} parent=1 // pred_check_branch
      %69 = sbr.rel (0) target = $region41
    $region40: #{tpu_custom_call.1} parent=1 // pred_region
      %70 = dma.done [#allocation3], 4096
    $region41: #{tpu_custom_call.1} parent=1 // pred_fallthru
      _
    // Predicated region
    $region42: #{tpu_custom_call.1} parent=1 // pred_check
      _
    $region43: #{tpu_custom_call.1} parent=1 // pred_check_branch
      %72 = sbr.rel (0) target = $region45
    $region44: #{tpu_custom_call.1} parent=1 // pred_region
      %73 = dma.done [#allocation6], 4096
    $region45: #{tpu_custom_call.1} parent=1 // pred_fallthru
      _
    // Predicated region
    $region46: #{tpu_custom_call.1} parent=1 // pred_check
      _
    $region47: #{tpu_custom_call.1} parent=1 // pred_check_branch
      %75 = sbr.rel (0) target = $region49
    $region48: #{tpu_custom_call.1} parent=1 // pred_region
      %76 = dma.done [#allocation6], 4096
    $region49: #{tpu_custom_call.1} parent=1 // pred_fallthru
      _
    %v77 = vld [vmem:[%s0] sm:$0xff]
    %v78 = vld [vmem:[#allocation2] sm:$0xff]
    %v79 = vld [vmem:[#allocation2 + $0x8] sm:$0xff]
    %v80 = vld [vmem:[#allocation2 + $0x10] sm:$0xff]
    %v81 = vld [vmem:[#allocation2 + $0x18] sm:$0xff]
    %v82 = vld [vmem:[#allocation2 + $0x20] sm:$0xff]
    %v83 = vld [vmem:[#allocation2 + $0x28] sm:$0xff]
    %v84 = vld [vmem:[#allocation2 + $0x30] sm:$0xff]
    %v85 = vld [vmem:[#allocation2 + $0x38] sm:$0xff]
    %v86 = vld [vmem:[#allocation2 + $0x40] sm:$0xff]
    %v87 = vld [vmem:[#allocation2 + $0x48] sm:$0xff]
    %v88 = vld [vmem:[#allocation2 + $0x50] sm:$0xff]
    %v89 = vld [vmem:[#allocation2 + $0x58] sm:$0xff]
    %v90 = vld [vmem:[#allocation2 + $0x60] sm:$0xff]
    %v91 = vld [vmem:[#allocation2 + $0x68] sm:$0xff]
    %v92 = vld [vmem:[#allocation2 + $0x70] sm:$0xff]
    %v93 = vld [vmem:[#allocation2 + $0x78] sm:$0xff]
    %v94 = vld [vmem:[#allocation2 + $0x80] sm:$0xff]
    %v95 = vld [vmem:[#allocation2 + $0x88] sm:$0xff]
    %v96 = vld [vmem:[#allocation2 + $0x90] sm:$0xff]
    %v97 = vld [vmem:[#allocation2 + $0x98] sm:$0xff]
    %v98 = vld [vmem:[#allocation2 + $0xa0] sm:$0xff]
    %v99 = vld [vmem:[#allocation2 + $0xa8] sm:$0xff]
    %v100 = vld [vmem:[#allocation2 + $0xb0] sm:$0xff]
    %v101 = vld [vmem:[#allocation2 + $0xb8] sm:$0xff]
    %v102 = vld [vmem:[#allocation2 + $0xc0] sm:$0xff]
    %v103 = vld [vmem:[#allocation2 + $0xc8] sm:$0xff]
    %v104 = vld [vmem:[#allocation2 + $0xd0] sm:$0xff]
    %v105 = vld [vmem:[#allocation2 + $0xd8] sm:$0xff]
    %v106 = vld [vmem:[#allocation2 + $0xe0] sm:$0xff]
    %v107 = vld [vmem:[#allocation2 + $0xe8] sm:$0xff]
    %v108 = vld [vmem:[#allocation2 + $0xf0] sm:$0xff]
    %v109 = vld [vmem:[#allocation2 + $0xf8] sm:$0xff]
    %v110 = vld [vmem:[%s2] sm:$0x3]
    %v112 = vlaneseq
    %v113 = vshrl.u32 %v112, 7
    %v114 = vsub.s32 0, %v113
    %v115 = vrot.slane %v110, %v114
    %v116 = vlaneseq
    %v117 = vshrl.u32 %v116, 7
    %v118 = vsub.s32 1, %v117
    %v119 = vrot.slane %v110, %v118
    %122 = vmatprep.subr.mxu0 %v79
    %123 = vmatpush1.msra.mxu0 %v78
    %124 = vmatprep.subr.mxu0 %v81
    %125 = vmatpush1.msra.mxu0 %v80
    %126 = vmatprep.subr.mxu0 %v83
    %127 = vmatpush1.msra.mxu0 %v82
    %128 = vmatprep.subr.mxu0 %v85
    %129 = vmatpush1.msra.mxu0 %v84
    %130 = vmatprep.subr.mxu0 %v87
    %131 = vmatpush1.msra.mxu0 %v86
    %132 = vmatprep.subr.mxu0 %v89
    %133 = vmatpush1.msra.mxu0 %v88
    %134 = vmatprep.subr.mxu0 %v91
    %135 = vmatpush1.msra.mxu0 %v90
    %136 = vmatprep.subr.mxu0 %v93
    %137 = vmatpush1.msra.mxu0 %v92
    %138 = vmatprep.subr.mxu0 %v95
    %139 = vmatpush1.msra.mxu0 %v94
    %140 = vmatprep.subr.mxu0 %v97
    %141 = vmatpush1.msra.mxu0 %v96
    %142 = vmatprep.subr.mxu0 %v99
    %143 = vmatpush1.msra.mxu0 %v98
    %144 = vmatprep.subr.mxu0 %v101
    %145 = vmatpush1.msra.mxu0 %v100
    %146 = vmatprep.subr.mxu0 %v103
    %147 = vmatpush1.msra.mxu0 %v102
    %148 = vmatprep.subr.mxu0 %v105
    %149 = vmatpush1.msra.mxu0 %v104
    %150 = vmatprep.subr.mxu0 %v107
    %151 = vmatpush1.msra.mxu0 %v106
    %152 = vmatprep.subr.mxu0 %v109
    %153 = vmatpush1.msra.mxu0 %v108
    %154 = vmatprep.subr.mxu0 0.0
    %155 = vmatpush1.msra.mxu0 0.0
    %156 = vmatprep.subr.mxu0 0.0
    %157 = vmatpush1.msra.mxu0 0.0
    %158 = vmatprep.subr.mxu0 0.0
    %159 = vmatpush1.msra.mxu0 0.0
    %160 = vmatprep.subr.mxu0 0.0
    %161 = vmatpush1.msra.mxu0 0.0
    %162 = vmatprep.subr.mxu0 0.0
    %163 = vmatpush1.msra.mxu0 0.0
    %164 = vmatprep.subr.mxu0 0.0
    %165 = vmatpush1.msra.mxu0 0.0
    %166 = vmatprep.subr.mxu0 0.0
    %167 = vmatpush1.msra.mxu0 0.0
    %168 = vmatprep.subr.mxu0 0.0
    %169 = vmatpush1.msra.mxu0 0.0
    %170 = vmatprep.subr.mxu0 0.0
    %171 = vmatpush1.msra.mxu0 0.0
    %172 = vmatprep.subr.mxu0 0.0
    %173 = vmatpush1.msra.mxu0 0.0
    %174 = vmatprep.subr.mxu0 0.0
    %175 = vmatpush1.msra.mxu0 0.0
    %176 = vmatprep.subr.mxu0 0.0
    %177 = vmatpush1.msra.mxu0 0.0
    %178 = vmatprep.subr.mxu0 0.0
    %179 = vmatpush1.msra.mxu0 0.0
    %180 = vmatprep.subr.mxu0 0.0
    %181 = vmatpush1.msra.mxu0 0.0
    %182 = vmatprep.subr.mxu0 0.0
    %183 = vmatpush1.msra.mxu0 0.0
    %184 = vmatprep.subr.mxu0 0.0
    %185 = vmatpush1.msra.mxu0 0.0
    %186 = vmatprep.mubr.f32.mxu0 0.0
    %187 = vmatmul.mubr.f32.gmra.mrb[0].mxu0 %v77
    %v188 = vpop.f32.mrb[0].mxu0
    %v189 = vadd.f32 %v115, %v188
    %v190 = vpop.f32.mrb[0].mxu0
    %v191 = vadd.f32 %v119, %v190
    %192 = vdwg.mxu0
    %v193 = vmax.f32 %v189, 0.0
    %v194 = vmax.f32 %v191, 0.0
    %v195 = vld [vmem:[#allocation5] sm:$0xff]
    %v196 = vld [vmem:[#allocation5 + $0x8] sm:$0xff]
    %v197 = vld [vmem:[#allocation5 + $0x10] sm:$0xff]
    %v198 = vld [vmem:[#allocation5 + $0x18] sm:$0xff]
    %v199 = vld [vmem:[#allocation5 + $0x20] sm:$0xff]
    %v200 = vld [vmem:[#allocation5 + $0x28] sm:$0xff]
    %v201 = vld [vmem:[#allocation5 + $0x30] sm:$0xff]
    %v202 = vld [vmem:[#allocation5 + $0x38] sm:$0xff]
    %v203 = vld [vmem:[#allocation5 + $0x40] sm:$0xff]
    %v204 = vld [vmem:[#allocation5 + $0x48] sm:$0xff]
    %v205 = vld [vmem:[#allocation5 + $0x50] sm:$0xff]
    %v206 = vld [vmem:[#allocation5 + $0x58] sm:$0xff]
    %v207 = vld [vmem:[#allocation5 + $0x60] sm:$0xff]
    %v208 = vld [vmem:[#allocation5 + $0x68] sm:$0xff]
    %v209 = vld [vmem:[#allocation5 + $0x70] sm:$0xff]
    %v210 = vld [vmem:[#allocation5 + $0x78] sm:$0xff]
    %v211 = vld [vmem:[#allocation5 + $0x80] sm:$0xff]
    %v212 = vld [vmem:[#allocation5 + $0x88] sm:$0xff]
    %v213 = vld [vmem:[#allocation5 + $0x90] sm:$0xff]
    %v214 = vld [vmem:[#allocation5 + $0x98] sm:$0xff]
    %v215 = vld [vmem:[#allocation5 + $0xa0] sm:$0xff]
    %v216 = vld [vmem:[#allocation5 + $0xa8] sm:$0xff]
    %v217 = vld [vmem:[#allocation5 + $0xb0] sm:$0xff]
    %v218 = vld [vmem:[#allocation5 + $0xb8] sm:$0xff]
    %v219 = vld [vmem:[#allocation5 + $0xc0] sm:$0xff]
    %v220 = vld [vmem:[#allocation5 + $0xc8] sm:$0xff]
    %v221 = vld [vmem:[#allocation5 + $0xd0] sm:$0xff]
    %v222 = vld [vmem:[#allocation5 + $0xd8] sm:$0xff]
    %v223 = vld [vmem:[#allocation5 + $0xe0] sm:$0xff]
    %v224 = vld [vmem:[#allocation5 + $0xe8] sm:$0xff]
    %v225 = vld [vmem:[#allocation5 + $0xf0] sm:$0xff]
    %v226 = vld [vmem:[#allocation5 + $0xf8] sm:$0xff]
    %v227 = vld [vmem:[%s5] sm:$0x1]
    %v229 = vlaneseq
    %v230 = vshrl.u32 %v229, 7
    %v231 = vsub.s32 0, %v230
    %v232 = vrot.slane %v227, %v231
    %234 = vmatprep.subr.mxu0 0.0
    %235 = vmatpush1.msra.mxu0 %v195
    %236 = vmatprep.subr.mxu0 0.0
    %237 = vmatpush1.msra.mxu0 %v196
    %238 = vmatprep.subr.mxu0 0.0
    %239 = vmatpush1.msra.mxu0 %v197
    %240 = vmatprep.subr.mxu0 0.0
    %241 = vmatpush1.msra.mxu0 %v198
    %242 = vmatprep.subr.mxu0 0.0
    %243 = vmatpush1.msra.mxu0 %v199
    %244 = vmatprep.subr.mxu0 0.0
    %245 = vmatpush1.msra.mxu0 %v200
    %246 = vmatprep.subr.mxu0 0.0
    %247 = vmatpush1.msra.mxu0 %v201
    %248 = vmatprep.subr.mxu0 0.0
    %249 = vmatpush1.msra.mxu0 %v202
    %250 = vmatprep.subr.mxu0 0.0
    %251 = vmatpush1.msra.mxu0 %v203
    %252 = vmatprep.subr.mxu0 0.0
    %253 = vmatpush1.msra.mxu0 %v204
    %254 = vmatprep.subr.mxu0 0.0
    %255 = vmatpush1.msra.mxu0 %v205
    %256 = vmatprep.subr.mxu0 0.0
    %257 = vmatpush1.msra.mxu0 %v206
    %258 = vmatprep.subr.mxu0 0.0
    %259 = vmatpush1.msra.mxu0 %v207
    %260 = vmatprep.subr.mxu0 0.0
    %261 = vmatpush1.msra.mxu0 %v208
    %262 = vmatprep.subr.mxu0 0.0
    %263 = vmatpush1.msra.mxu0 %v209
    %264 = vmatprep.subr.mxu0 0.0
    %265 = vmatpush1.msra.mxu0 %v210
    %266 = vmatprep.subr.mxu0 0.0
    %267 = vmatpush1.msra.mxu0 %v211
    %268 = vmatprep.subr.mxu0 0.0
    %269 = vmatpush1.msra.mxu0 %v212
    %270 = vmatprep.subr.mxu0 0.0
    %271 = vmatpush1.msra.mxu0 %v213
    %272 = vmatprep.subr.mxu0 0.0
    %273 = vmatpush1.msra.mxu0 %v214
    %274 = vmatprep.subr.mxu0 0.0
    %275 = vmatpush1.msra.mxu0 %v215
    %276 = vmatprep.subr.mxu0 0.0
    %277 = vmatpush1.msra.mxu0 %v216
    %278 = vmatprep.subr.mxu0 0.0
    %279 = vmatpush1.msra.mxu0 %v217
    %280 = vmatprep.subr.mxu0 0.0
    %281 = vmatpush1.msra.mxu0 %v218
    %282 = vmatprep.subr.mxu0 0.0
    %283 = vmatpush1.msra.mxu0 %v219
    %284 = vmatprep.subr.mxu0 0.0
    %285 = vmatpush1.msra.mxu0 %v220
    %286 = vmatprep.subr.mxu0 0.0
    %287 = vmatpush1.msra.mxu0 %v221
    %288 = vmatprep.subr.mxu0 0.0
    %289 = vmatpush1.msra.mxu0 %v222
    %290 = vmatprep.subr.mxu0 0.0
    %291 = vmatpush1.msra.mxu0 %v223
    %292 = vmatprep.subr.mxu0 0.0
    %293 = vmatpush1.msra.mxu0 %v224
    %294 = vmatprep.subr.mxu0 0.0
    %295 = vmatpush1.msra.mxu0 %v225
    %296 = vmatprep.subr.mxu0 0.0
    %297 = vmatpush1.msra.mxu0 %v226
    %298 = vmatprep.mubr.f32.mxu0 %v194
    %299 = vmatmul.mubr.f32.gmra.mrb[0].mxu0 %v193
    %v300 = vpop.f32.mrb[0].mxu0
    %v301 = vadd.f32 %v232, %v300
    %v302 = vpop.f32.mrb[0].mxu0
    %303 = vdwg.mxu0
    %v304 = vld [vmem:[#allocation7] sm:$0xff]
    %v305 = vld [vmem:[#allocation7 + $0x8] sm:$0xff]
    %v306 = vld [vmem:[#allocation7 + $0x10] sm:$0xff]
    %v307 = vld [vmem:[#allocation7 + $0x18] sm:$0xff]
    %v308 = vld [vmem:[#allocation7 + $0x20] sm:$0xff]
    %v309 = vld [vmem:[#allocation7 + $0x28] sm:$0xff]
    %v310 = vld [vmem:[#allocation7 + $0x30] sm:$0xff]
    %v311 = vld [vmem:[#allocation7 + $0x38] sm:$0xff]
    %v312 = vld [vmem:[#allocation7 + $0x40] sm:$0xff]
    %v313 = vld [vmem:[#allocation7 + $0x48] sm:$0xff]
    %v314 = vld [vmem:[#allocation7 + $0x50] sm:$0xff]
    %v315 = vld [vmem:[#allocation7 + $0x58] sm:$0xff]
    %v316 = vld [vmem:[#allocation7 + $0x60] sm:$0xff]
    %v317 = vld [vmem:[#allocation7 + $0x68] sm:$0xff]
    %v318 = vld [vmem:[#allocation7 + $0x70] sm:$0xff]
    %v319 = vld [vmem:[#allocation7 + $0x78] sm:$0xff]
    %v320 = vld [vmem:[#allocation7 + $0x80] sm:$0xff]
    %v321 = vld [vmem:[#allocation7 + $0x88] sm:$0xff]
    %v322 = vld [vmem:[#allocation7 + $0x90] sm:$0xff]
    %v323 = vld [vmem:[#allocation7 + $0x98] sm:$0xff]
    %v324 = vld [vmem:[#allocation7 + $0xa0] sm:$0xff]
    %v325 = vld [vmem:[#allocation7 + $0xa8] sm:$0xff]
    %v326 = vld [vmem:[#allocation7 + $0xb0] sm:$0xff]
    %v327 = vld [vmem:[#allocation7 + $0xb8] sm:$0xff]
    %v328 = vld [vmem:[#allocation7 + $0xc0] sm:$0xff]
    %v329 = vld [vmem:[#allocation7 + $0xc8] sm:$0xff]
    %v330 = vld [vmem:[#allocation7 + $0xd0] sm:$0xff]
    %v331 = vld [vmem:[#allocation7 + $0xd8] sm:$0xff]
    %v332 = vld [vmem:[#allocation7 + $0xe0] sm:$0xff]
    %v333 = vld [vmem:[#allocation7 + $0xe8] sm:$0xff]
    %v334 = vld [vmem:[#allocation7 + $0xf0] sm:$0xff]
    %v335 = vld [vmem:[#allocation7 + $0xf8] sm:$0xff]
    %v336 = vld [vmem:[%s6] sm:$0x1]
    %v338 = vlaneseq
    %v339 = vshrl.u32 %v338, 7
    %v340 = vsub.s32 0, %v339
    %v341 = vrot.slane %v336, %v340
    %343 = vmatprep.subr.mxu0 0.0
    %344 = vmatpush1.msra.mxu0 %v304
    %345 = vmatprep.subr.mxu0 0.0
    %346 = vmatpush1.msra.mxu0 %v305
    %347 = vmatprep.subr.mxu0 0.0
    %348 = vmatpush1.msra.mxu0 %v306
    %349 = vmatprep.subr.mxu0 0.0
    %350 = vmatpush1.msra.mxu0 %v307
    %351 = vmatprep.subr.mxu0 0.0
    %352 = vmatpush1.msra.mxu0 %v308
    %353 = vmatprep.subr.mxu0 0.0
    %354 = vmatpush1.msra.mxu0 %v309
    %355 = vmatprep.subr.mxu0 0.0
    %356 = vmatpush1.msra.mxu0 %v310
    %357 = vmatprep.subr.mxu0 0.0
    %358 = vmatpush1.msra.mxu0 %v311
    %359 = vmatprep.subr.mxu0 0.0
    %360 = vmatpush1.msra.mxu0 %v312
    %361 = vmatprep.subr.mxu0 0.0
    %362 = vmatpush1.msra.mxu0 %v313
    %363 = vmatprep.subr.mxu0 0.0
    %364 = vmatpush1.msra.mxu0 %v314
    %365 = vmatprep.subr.mxu0 0.0
    %366 = vmatpush1.msra.mxu0 %v315
    %367 = vmatprep.subr.mxu0 0.0
    %368 = vmatpush1.msra.mxu0 %v316
    %369 = vmatprep.subr.mxu0 0.0
    %370 = vmatpush1.msra.mxu0 %v317
    %371 = vmatprep.subr.mxu0 0.0
    %372 = vmatpush1.msra.mxu0 %v318
    %373 = vmatprep.subr.mxu0 0.0
    %374 = vmatpush1.msra.mxu0 %v319
    %375 = vmatprep.subr.mxu0 0.0
    %376 = vmatpush1.msra.mxu0 %v320
    %377 = vmatprep.subr.mxu0 0.0
    %378 = vmatpush1.msra.mxu0 %v321
    %379 = vmatprep.subr.mxu0 0.0
    %380 = vmatpush1.msra.mxu0 %v322
    %381 = vmatprep.subr.mxu0 0.0
    %382 = vmatpush1.msra.mxu0 %v323
    %383 = vmatprep.subr.mxu0 0.0
    %384 = vmatpush1.msra.mxu0 %v324
    %385 = vmatprep.subr.mxu0 0.0
    %386 = vmatpush1.msra.mxu0 %v325
    %387 = vmatprep.subr.mxu0 0.0
    %388 = vmatpush1.msra.mxu0 %v326
    %389 = vmatprep.subr.mxu0 0.0
    %390 = vmatpush1.msra.mxu0 %v327
    %391 = vmatprep.subr.mxu0 0.0
    %392 = vmatpush1.msra.mxu0 %v328
    %393 = vmatprep.subr.mxu0 0.0
    %394 = vmatpush1.msra.mxu0 %v329
    %395 = vmatprep.subr.mxu0 0.0
    %396 = vmatpush1.msra.mxu0 %v330
    %397 = vmatprep.subr.mxu0 0.0
    %398 = vmatpush1.msra.mxu0 %v331
    %399 = vmatprep.subr.mxu0 0.0
    %400 = vmatpush1.msra.mxu0 %v332
    %401 = vmatprep.subr.mxu0 0.0
    %402 = vmatpush1.msra.mxu0 %v333
    %403 = vmatprep.subr.mxu0 0.0
    %404 = vmatpush1.msra.mxu0 %v334
    %405 = vmatprep.subr.mxu0 0.0
    %406 = vmatpush1.msra.mxu0 %v335
    %407 = vmatprep.mubr.f32.mxu0 %v194
    %408 = vmatmul.mubr.f32.gmra.mrb[0].mxu0 %v193
    %v409 = vpop.f32.mrb[0].mxu0
    %v410 = vadd.f32 %v341, %v409
    %v411 = vpop.f32.mrb[0].mxu0
    %412 = vdwg.mxu0
    %v413 = vtanh.pop %v301
    %v414 = vld [vmem:[%s7] sm:$0x1]
    %v416 = vlaneseq
    %v417 = vshrl.u32 %v416, 7
    %v418 = vsub.s32 0, %v417
    %v419 = vrot.slane %v414, %v418
    %v421 = vmul.f32 %v413, %v419
    %v422 = vadd.f32 %v77, %v410
    %v423 = vmul.f32 %v421, 1.442695
    %v424 = vpow.pop %v423
    %v425 = vmul.f32 %v422, %v424
    %426 = vst [vmem:[#allocation8] sm:$0xff] %v425
    %v427 = vld [vmem:[%s8] sm:$0xff]
    %v428 = vld [vmem:[%s8 + $0x8] sm:$0xff]
    %v429 = vld [vmem:[%s8 + $0x10] sm:$0xff]
    %v430 = vld [vmem:[%s8 + $0x18] sm:$0xff]
    %v431 = vld [vmem:[%s8 + $0x20] sm:$0xff]
    %v432 = vld [vmem:[%s8 + $0x28] sm:$0xff]
    %v433 = vld [vmem:[%s8 + $0x30] sm:$0xff]
    %v434 = vld [vmem:[%s8 + $0x38] sm:$0xff]
    %v435 = vld [vmem:[%s8 + $0x40] sm:$0xff]
    %v436 = vld [vmem:[%s8 + $0x48] sm:$0xff]
    %v437 = vld [vmem:[%s8 + $0x50] sm:$0xff]
    %v438 = vld [vmem:[%s8 + $0x58] sm:$0xff]
    %v439 = vld [vmem:[%s8 + $0x60] sm:$0xff]
    %v440 = vld [vmem:[%s8 + $0x68] sm:$0xff]
    %v441 = vld [vmem:[%s8 + $0x70] sm:$0xff]
    %v442 = vld [vmem:[%s8 + $0x78] sm:$0xff]
    %443 = vmatprep.subr.mxu0 0.0
    %444 = vmatpush1.msra.mxu0 %v427
    %445 = vmatprep.subr.mxu0 0.0
    %446 = vmatpush1.msra.mxu0 %v428
    %447 = vmatprep.subr.mxu0 0.0
    %448 = vmatpush1.msra.mxu0 %v429
    %449 = vmatprep.subr.mxu0 0.0
    %450 = vmatpush1.msra.mxu0 %v430
    %451 = vmatprep.subr.mxu0 0.0
    %452 = vmatpush1.msra.mxu0 %v431
    %453 = vmatprep.subr.mxu0 0.0
    %454 = vmatpush1.msra.mxu0 %v432
    %455 = vmatprep.subr.mxu0 0.0
    %456 = vmatpush1.msra.mxu0 %v433
    %457 = vmatprep.subr.mxu0 0.0
    %458 = vmatpush1.msra.mxu0 %v434
    %459 = vmatprep.subr.mxu0 0.0
    %460 = vmatpush1.msra.mxu0 %v435
    %461 = vmatprep.subr.mxu0 0.0
    %462 = vmatpush1.msra.mxu0 %v436
    %463 = vmatprep.subr.mxu0 0.0
    %464 = vmatpush1.msra.mxu0 %v437
    %465 = vmatprep.subr.mxu0 0.0
    %466 = vmatpush1.msra.mxu0 %v438
    %467 = vmatprep.subr.mxu0 0.0
    %468 = vmatpush1.msra.mxu0 %v439
    %469 = vmatprep.subr.mxu0 0.0
    %470 = vmatpush1.msra.mxu0 %v440
    %471 = vmatprep.subr.mxu0 0.0
    %472 = vmatpush1.msra.mxu0 %v441
    %473 = vmatprep.subr.mxu0 0.0
    %474 = vmatpush1.msra.mxu0 %v442
    %475 = vmatprep.subr.mxu0 0.0
    %476 = vmatpush1.msra.mxu0 0.0
    %477 = vmatprep.subr.mxu0 0.0
    %478 = vmatpush1.msra.mxu0 0.0
    %479 = vmatprep.subr.mxu0 0.0
    %480 = vmatpush1.msra.mxu0 0.0
    %481 = vmatprep.subr.mxu0 0.0
    %482 = vmatpush1.msra.mxu0 0.0
    %483 = vmatprep.subr.mxu0 0.0
    %484 = vmatpush1.msra.mxu0 0.0
    %485 = vmatprep.subr.mxu0 0.0
    %486 = vmatpush1.msra.mxu0 0.0
    %487 = vmatprep.subr.mxu0 0.0
    %488 = vmatpush1.msra.mxu0 0.0
    %489 = vmatprep.subr.mxu0 0.0
    %490 = vmatpush1.msra.mxu0 0.0
    %491 = vmatprep.subr.mxu0 0.0
    %492 = vmatpush1.msra.mxu0 0.0
    %493 = vmatprep.subr.mxu0 0.0
    %494 = vmatpush1.msra.mxu0 0.0
    %495 = vmatprep.subr.mxu0 0.0
    %496 = vmatpush1.msra.mxu0 0.0
    %497 = vmatprep.subr.mxu0 0.0
    %498 = vmatpush1.msra.mxu0 0.0
    %499 = vmatprep.subr.mxu0 0.0
    %500 = vmatpush1.msra.mxu0 0.0
    %501 = vmatprep.subr.mxu0 0.0
    %502 = vmatpush1.msra.mxu0 0.0
    %503 = vmatprep.subr.mxu0 0.0
    %504 = vmatpush1.msra.mxu0 0.0
    %505 = vmatprep.subr.mxu0 0.0
    %506 = vmatpush1.msra.mxu0 0.0
    %507 = vmatprep.mubr.f32.mxu0 0.0
    %508 = vmatmul.mubr.f32.gmra.mrb[0].mxu0 %v421
    %v509 = vpop.f32.mrb[0].mxu0
    %v510 = vadd.f32 0.0, %v509
    %v511 = vpop.f32.mrb[0].mxu0
    %512 = vdwg.mxu0
    %vm513 = vcmask 64512
    %514 = vst.msk [vmem:[#allocation9] sm:$0xff] %vm513, %v510
    // Predicated region
    $region50: #{tpu_custom_call.1} parent=1 // pred_check
      _
    $region51: #{tpu_custom_call.1} parent=1 // pred_check_branch
      %516 = sbr.rel (0) target = $region53
    $region52: #{tpu_custom_call.1} parent=1 // pred_region
      %s518 = ssub.s32 128, 128
      %519 = vsyncadd [#allocation4], %s518
      %s521 = sshll.u32 [#allocation8], 4
      %s522 = int_to_ptr.vmem [resolvable:$true] %s521
      %524 = dma.vmem_to_hbm [thread:$0]  %s522, 128, %s9, [#allocation4]
    $region53: #{tpu_custom_call.1} parent=1 // pred_fallthru
      _
    // Predicated region
    $region54: #{tpu_custom_call.1} parent=1 // pred_check
      _
    $region55: #{tpu_custom_call.1} parent=1 // pred_check_branch
      %526 = sbr.rel (0) target = $region57
    $region56: #{tpu_custom_call.1} parent=1 // pred_region
      %s528 = ssub.s32 128, 128
      %529 = vsyncadd [#allocation10], %s528
      %s531 = sshll.u32 [#allocation9], 4
      %s532 = int_to_ptr.vmem [resolvable:$true] %s531
      %534 = dma.vmem_to_hbm [thread:$0]  %s532, 128, %s10, [#allocation10]
    $region57: #{tpu_custom_call.1} parent=1 // pred_fallthru
      _
    // Predicated region
    $region58: #{tpu_custom_call.1} parent=1 // pred_check
      _
    $region59: #{tpu_custom_call.1} parent=1 // pred_check_branch
      %536 = sbr.rel (0) target = $region61
    $region60: #{tpu_custom_call.1} parent=1 // pred_region
      %537 = dma.done [#allocation4], 128
    $region61: #{tpu_custom_call.1} parent=1 // pred_fallthru
      _
    // Predicated region
    $region62: #{tpu_custom_call.1} parent=1 // pred_check
      _
    $region63: #{tpu_custom_call.1} parent=1 // pred_check_branch
      %539 = sbr.rel (0) target = $region65
    $region64: #{tpu_custom_call.1} parent=1 // pred_region
      %540 = dma.done [#allocation10], 128
    $region65: #{tpu_custom_call.1} parent=1 // pred_fallthru
      _
    %541 = vsyncpa [#allocation3], 1
    %542 = vsyncpa [#allocation6], 1
    %543 = vsyncpa [#allocation4], 1
    %544 = vsyncpa [#allocation10], 1

</llo_original>
